<compile_context>
chip_gen: v7x
topology: tpu7x:2x2x1
jax: 0.10.0
libtpu: 0.0.40
codegen_flags: <defaults>
</compile_context>

<pallas_src>
import functools

import jax
import jax.numpy as jnp
from jax.experimental import pallas as pl
from jax.experimental.pallas import tpu as pltpu

LANES = 128
SUBLANES = 8
MAX_TILE_ROWS = 4096   # 2 MiB per f32 input block; 2 inputs x 2 buffers = 8 MiB VMEM
CHUNK_ROWS = 64        # inner-loop chunk: 8 f32 vregs per input, no big loss temp


def _round_up(x, m):
    return ((x + m - 1) // m) * m


def _loss_elem(p, w):
    """Elementwise hinge loss * weight (f32)."""
    d = 0.4 - p
    loss_left = 8.0 * d * d * d           # (2*(0.4 - p))**3
    loss_right = 4.0 * (p - 0.65)
    return jnp.maximum(jnp.maximum(loss_left, loss_right), 0.0) * w


def _loss_kernel(p_ref, w_ref, acc_ref, *, rows, tile_rows, chunk, steps, needs_mask):
    """One (tile_rows, 128) tile folded chunk-by-chunk into a resident (8,128) acc."""
    # Zero this partition's accumulator on the first step of the reduction axis.
    @pl.when(pl.program_id(1) == 0)
    def _():
        acc_ref[...] = jnp.zeros_like(acc_ref)

    # Global row offset of this tile (unclamped: phantom megacore steps map past
    # `rows` and are fully masked below).
    tile_row0 = (pl.program_id(0) * steps + pl.program_id(1)) * tile_rows
    num_chunks = tile_rows // chunk

    def body(c, carry):
        r0 = pl.multiple_of(c * chunk, chunk)
        p = p_ref[pl.ds(r0, chunk), :].astype(jnp.float32)
        w = w_ref[pl.ds(r0, chunk), :].astype(jnp.float32)
        loss = _loss_elem(p, w)
        if needs_mask:
            row_ids = (tile_row0 + r0
                       + jax.lax.broadcasted_iota(jnp.int32, (chunk, LANES), 0))
            loss = jnp.where(row_ids < rows, loss, 0.0)
        # Sublane fold: (chunk,128) -> (8,128), pure VPU adds, single-vreg carry.
        return carry + loss.reshape(-1, SUBLANES, LANES).sum(axis=0)

    part_sum = jax.lax.fori_loop(
        0, num_chunks, body, jnp.zeros((SUBLANES, LANES), jnp.float32), unroll=True)
    acc_ref[...] += part_sum


def loss_p_pallas(p, weight):
    """Scalar float32 loss matching the PyTorch module's forward."""
    assert p.shape == weight.shape

    # Accept f32/bf16 directly (upcast per-chunk in-kernel); anything else -> f32.
    def _canon(x):
        return x if x.dtype in (jnp.float32, jnp.bfloat16) else x.astype(jnp.float32)

    p = _canon(p)
    weight = _canon(weight)

    n = p.size
    p_flat = p.reshape(-1)
    w_flat = weight.reshape(-1)

    # Sub-row ragged tail (n % 128 != 0): tiny pure-jnp fixup, no full-array padding.
    n_main = (n // LANES) * LANES
    tail = jnp.float32(0.0)
    if n_main != n:
        tail = jnp.sum(_loss_elem(p_flat[n_main:].astype(jnp.float32),
                                  w_flat[n_main:].astype(jnp.float32)))
        p_flat = p_flat[:n_main]
        w_flat = w_flat[:n_main]
    if n_main == 0:
        return tail

    rows = n_main // LANES
    # bf16 blocks need a (16,128)-aligned row dim.
    sub = 16 if (p_flat.dtype == jnp.bfloat16 or w_flat.dtype == jnp.bfloat16) else SUBLANES

    if rows >= CHUNK_ROWS:
        tile_rows = min(MAX_TILE_ROWS, _round_up(rows, CHUNK_ROWS))
        chunk = CHUNK_ROWS
    else:
        tile_rows = _round_up(rows, sub)
        chunk = tile_rows
    num_tiles = pl.cdiv(rows, tile_rows)

    # Megacore (v7x): always split across 2 partitions when there is >1 tile; the
    # possibly-phantom last step of partition 1 is clamped in the index_map and
    # zeroed by the in-kernel row mask.  No-op on v5e/v6e (1 TC).
    num_parts = 2 if num_tiles >= 2 else 1
    steps = pl.cdiv(num_tiles, num_parts)
    needs_mask = (num_parts * steps * tile_rows != rows)

    p2 = p_flat.reshape(rows, LANES)
    w2 = w_flat.reshape(rows, LANES)

    def in_index_map(part, step):
        idx = part * steps + step
        return (jnp.minimum(idx, num_tiles - 1), 0)   # clamp phantom steps

    kernel = functools.partial(
        _loss_kernel, rows=rows, tile_rows=tile_rows, chunk=chunk,
        steps=steps, needs_mask=needs_mask)

    partials = pl.pallas_call(
        kernel,
        out_shape=jax.ShapeDtypeStruct((num_parts * SUBLANES, LANES), jnp.float32),
        grid_spec=pltpu.PrefetchScalarGridSpec(
            num_scalar_prefetch=0,
            grid=(num_parts, steps),
            in_specs=[
                pl.BlockSpec((tile_rows, LANES), in_index_map),
                pl.BlockSpec((tile_rows, LANES), in_index_map),
            ],
            # Output block index constant along the step axis -> resident accumulator.
            out_specs=pl.BlockSpec((SUBLANES, LANES), lambda part, step: (part, 0)),
        ),
        compiler_params=pltpu.CompilerParams(
            dimension_semantics=("parallel", "arbitrary"),
        ),
    )(p2, w2)

    # Single final cross-lane/sublane reduce over <= num_parts*8*128 partials.
    return jnp.sum(partials) + tail


def _loss_p_ref(p, weight):
    p = p.astype(jnp.float32)
    weight = weight.astype(jnp.float32)
    loss_left = (2.0 * (0.4 - p)) ** 3
    loss_right = 4.0 * (p - 0.65)
    loss = jnp.maximum(jnp.maximum(loss_left, loss_right), 0.0)
    return jnp.sum(loss * weight)


if __name__ == "__main__":
    key = jax.random.PRNGKey(0)
    kp, kw = jax.random.split(key)
    # Small shapes consistent with an NCHW probability map + per-pixel weight.
    p = jax.random.uniform(kp, (2, 4, 16, 16), dtype=jnp.float32)
    weight = jax.random.uniform(kw, (2, 4, 16, 16), dtype=jnp.float32)

    out = loss_p_pallas(p, weight)
    out = jax.block_until_ready(out)

    ref = _loss_p_ref(p, weight)
    assert jnp.allclose(out, ref, rtol=1e-5, atol=1e-5), (out, ref)

    print("KERNEL_OK")
</pallas_src>

<mosaic_0001>
module attributes {stable_mosaic.version = 11 : i64} {
  func.func @_loss_kernel(%arg0: i32, %arg1: i32, %arg2: memref<16x128xf32, #tpu.memory_space<vmem>>, %arg3: memref<16x128xf32, #tpu.memory_space<vmem>>, %arg4: memref<8x128xf32, #tpu.memory_space<vmem>>) attributes {dimension_semantics = [#tpu.dimension_semantics<parallel>, #tpu.dimension_semantics<arbitrary>], iteration_bounds = array<i64: 1, 1>, scalar_prefetch = 0 : i64, scratch_operands = 0 : i64, tpu.core_type = #tpu.core_type<tc>, window_params = [{transform_indices = @transform_0, window_bounds = array<i64: 16, 128>}, {transform_indices = @transform_1, window_bounds = array<i64: 16, 128>}, {transform_indices = @transform_2, window_bounds = array<i64: 8, 128>}]} {
    %c0_i32 = arith.constant 0 : i32
    %0 = arith.cmpi eq, %arg1, %c0_i32 : i32
    %1 = arith.extui %0 : i1 to i32
    %c0_i32_0 = arith.constant 0 : i32
    %2 = arith.cmpi ne, %1, %c0_i32_0 : i32
    scf.if %2 {
      %cst_13 = arith.constant 0.000000e+00 : f32
      %30 = vector.broadcast %cst_13 : f32 to vector<8x128xf32>
      %c0_14 = arith.constant 0 : index
      %c0_15 = arith.constant 0 : index
      %31 = vector.load %arg4[%c0_14, %c0_15] : memref<8x128xf32, #tpu.memory_space<vmem>>, vector<8x128xf32>
      tpu.vector_store %arg4[%c0_14, %c0_15], %30 {strides = array<i32>} : memref<8x128xf32, #tpu.memory_space<vmem>>, vector<8x128xf32>,
    } else {
    }
    %cst = arith.constant 0.000000e+00 : f32
    %3 = vector.broadcast %cst : f32 to vector<8x128xf32>
    %c0_i32_1 = arith.constant 0 : i32
    %c16_i32 = arith.constant 16 : i32
    %4 = arith.muli %c0_i32_1, %c16_i32 : i32
    %5 = tpu.assume_multiple %4, 16 : i32
    %6 = arith.index_cast %5 : i32 to index
    %c0 = arith.constant 0 : index
    %7 = vector.load %arg2[%6, %c0] : memref<16x128xf32, #tpu.memory_space<vmem>>, vector<16x128xf32>
    %8 = arith.index_cast %5 : i32 to index
    %c0_2 = arith.constant 0 : index
    %9 = vector.load %arg3[%8, %c0_2] : memref<16x128xf32, #tpu.memory_space<vmem>>, vector<16x128xf32>
    %cst_3 = arith.constant 4.000000e-01 : f32
    %10 = vector.broadcast %cst_3 : f32 to vector<16x128xf32>
    %11 = arith.subf %10, %7 : vector<16x128xf32>
    %cst_4 = arith.constant 8.000000e+00 : f32
    %12 = vector.broadcast %cst_4 : f32 to vector<16x128xf32>
    %13 = arith.mulf %12, %11 : vector<16x128xf32>
    %14 = arith.mulf %13, %11 : vector<16x128xf32>
    %15 = arith.mulf %14, %11 : vector<16x128xf32>
    %cst_5 = arith.constant 6.500000e-01 : f32
    %16 = vector.broadcast %cst_5 : f32 to vector<16x128xf32>
    %17 = arith.subf %7, %16 : vector<16x128xf32>
    %cst_6 = arith.constant 4.000000e+00 : f32
    %18 = vector.broadcast %cst_6 : f32 to vector<16x128xf32>
    %19 = arith.mulf %18, %17 : vector<16x128xf32>
    %20 = arith.maximumf %15, %19 : vector<16x128xf32>
    %cst_7 = arith.constant 0.000000e+00 : f32
    %21 = vector.broadcast %cst_7 : f32 to vector<16x128xf32>
    %22 = arith.maximumf %20, %21 : vector<16x128xf32>
    %23 = arith.mulf %22, %9 : vector<16x128xf32>
    %24 = vector.shape_cast %23 : vector<16x128xf32> to vector<2x8x128xf32>
    %cst_8 = arith.constant dense<0.000000e+00> : vector<8x128xf32>
    %25 = vector.multi_reduction <add>, %24, %cst_8 [0] : vector<2x8x128xf32> to vector<8x128xf32>
    %26 = arith.addf %3, %25 : vector<8x128xf32>
    %c1_i32 = arith.constant 1 : i32
    %c0_9 = arith.constant 0 : index
    %c0_10 = arith.constant 0 : index
    %27 = vector.load %arg4[%c0_9, %c0_10] : memref<8x128xf32, #tpu.memory_space<vmem>>, vector<8x128xf32>
    %28 = arith.addf %27, %26 : vector<8x128xf32>
    %c0_11 = arith.constant 0 : index
    %c0_12 = arith.constant 0 : index
    %29 = vector.load %arg4[%c0_11, %c0_12] : memref<8x128xf32, #tpu.memory_space<vmem>>, vector<8x128xf32>
    tpu.vector_store %arg4[%c0_11, %c0_12], %28 {strides = array<i32>} : memref<8x128xf32, #tpu.memory_space<vmem>>, vector<8x128xf32>,
    return
  }
  func.func @transform_0(%arg0: i32, %arg1: i32) -> (i32, i32) {
    %c1_i32 = arith.constant 1 : i32
    %0 = arith.muli %arg0, %c1_i32 : i32
    %1 = arith.addi %0, %arg1 : i32
    %c0_i32 = arith.constant 0 : i32
    %2 = arith.minsi %1, %c0_i32 : i32
    %c0_i32_0 = arith.constant 0 : i32
    %c0_i32_1 = arith.constant 0 : i32
    return %2, %c0_i32_0 : i32, i32
  }
  func.func @transform_1(%arg0: i32, %arg1: i32) -> (i32, i32) {
    %c1_i32 = arith.constant 1 : i32
    %0 = arith.muli %arg0, %c1_i32 : i32
    %1 = arith.addi %0, %arg1 : i32
    %c0_i32 = arith.constant 0 : i32
    %2 = arith.minsi %1, %c0_i32 : i32
    %c0_i32_0 = arith.constant 0 : i32
    %c0_i32_1 = arith.constant 0 : i32
    return %2, %c0_i32_0 : i32, i32
  }
  func.func @transform_2(%arg0: i32, %arg1: i32) -> (i32, i32) {
    %c0_i32 = arith.constant 0 : i32
    %c0_i32_0 = arith.constant 0 : i32
    return %arg0, %c0_i32 : i32, i32
  }
}

</mosaic_0001>

<llo_original>
// kernel: tpu_custom_call.1
$region0: #{tpu_custom_call.1}
  #allocation0 [shape = 'u32[]', space=smem, size = 0x4, offset = 0x4, fixed_abs, tag = 'smem constant byte address 0x4 - core index']
  #allocation1 [shape = 'u32[144,128]{1,0:T(1,128)}', space=vmem, size = 0x12000, scoped, tag = 'internal scratch']
  %s0 = inlined_call_operand.hbm [shape: f32[16,128], index: 0, kind: input, shape index: {}]
  %s1 = inlined_call_operand.hbm [shape: f32[16,128], index: 1, kind: input, shape index: {}]
  %s2 = inlined_call_operand.hbm [shape: f32[8,128], index: 2, kind: output, shape index: {}]
  %s3 = sld [smem:[#allocation0]]
  $region30: #{tpu_custom_call.1} parent=0
    _
  %s5 = ssub.s32 1, %s3
  %s6 = scalar_select 0, %s5, %s3
  $region1: #{tpu_custom_call.1} parent=0
    #allocation2 [shape = 'u8[8192]{0}', space=vmem, size = 0x2000, scoped, tag = 'input window, operand 0, single buffered']
    #allocation3 [shape = 's32[1]{0}', space=sflag, size = 0x4, scoped, tag = 'scoped memory for tpu_custom_call.1']
    #allocation4 [shape = 's32[1]{0}', space=sflag, size = 0x4, scoped, tag = 'scoped memory for tpu_custom_call.1']
    #allocation5 [shape = 'u8[8192]{0}', space=vmem, size = 0x2000, scoped, tag = 'input window, operand 1, single buffered']
    #allocation6 [shape = 's32[1]{0}', space=sflag, size = 0x4, scoped, tag = 'scoped memory for tpu_custom_call.1']
    #allocation7 [shape = 'u8[4096]{0}', space=vmem, size = 0x1000, scoped, tag = 'output window, operand 0, single buffered']
    %7 = vsyncpa [#allocation3], 0
    %8 = vsyncpa [#allocation6], 0
    %9 = vsyncpa [#allocation4], 0
    // Predicated region
    $region2: #{tpu_custom_call.1} parent=1 // pred_check
      _
    $region3: #{tpu_custom_call.1} parent=1 // pred_check_branch
      %11 = sbr.rel (0) target = $region5
    $region4: #{tpu_custom_call.1} parent=1 // pred_region
      %s12 = sadd.s32 0, 0
      %p13 = scmp.lt.s32.totalorder %s12, 0
      %s14 = scalar_select %p13, %s12, 0
      %s15 = smul.u32 2, %s14
      %s17 = ssub.s32 256, 256
      %18 = vsyncadd [#allocation3], %s17
      %s19 = smul.addr %s15, 128
      %s20 = scalar_lea.hbm %s0, %s19
      %s21 = sshll.u32 [#allocation2], 4
      %s22 = int_to_ptr.vmem [resolvable:$true] %s21
      %27 = dma.hbm_to_vmem [thread:$0]  %s20, 256, %s22, [#allocation3], 128, 128, 8
    $region5: #{tpu_custom_call.1} parent=1 // pred_fallthru
      _
    // Predicated region
    $region6: #{tpu_custom_call.1} parent=1 // pred_check
      _
    $region7: #{tpu_custom_call.1} parent=1 // pred_check_branch
      %29 = sbr.rel (0) target = $region9
    $region8: #{tpu_custom_call.1} parent=1 // pred_region
      %s30 = sadd.s32 0, 0
      %p31 = scmp.lt.s32.totalorder %s30, 0
      %s32 = scalar_select %p31, %s30, 0
      %s33 = smul.u32 2, %s32
      %s35 = ssub.s32 256, 256
      %36 = vsyncadd [#allocation6], %s35
      %s37 = smul.addr %s33, 128
      %s38 = scalar_lea.hbm %s1, %s37
      %s39 = sshll.u32 [#allocation5], 4
      %s40 = int_to_ptr.vmem [resolvable:$true] %s39
      %45 = dma.hbm_to_vmem [thread:$0]  %s38, 256, %s40, [#allocation6], 128, 128, 8
    $region9: #{tpu_custom_call.1} parent=1 // pred_fallthru
      _
    // Predicated region
    $region10: #{tpu_custom_call.1} parent=1 // pred_check
      _
    $region11: #{tpu_custom_call.1} parent=1 // pred_check_branch
      %47 = sbr.rel (0) target = $region13
    $region12: #{tpu_custom_call.1} parent=1 // pred_region
      %48 = dma.done [#allocation3], 256
    $region13: #{tpu_custom_call.1} parent=1 // pred_fallthru
      _
    // Predicated region
    $region14: #{tpu_custom_call.1} parent=1 // pred_check
      _
    $region15: #{tpu_custom_call.1} parent=1 // pred_check_branch
      %50 = sbr.rel (0) target = $region17
    $region16: #{tpu_custom_call.1} parent=1 // pred_region
      %51 = dma.done [#allocation6], 256
    $region17: #{tpu_custom_call.1} parent=1 // pred_fallthru
      _
    %s52 = sadd.s32 0, 0
    %p53 = scmp.lt.s32.totalorder %s52, 0
    %s54 = scalar_select %p53, %s52, 0
    %s55 = smul.u32 2, %s54
    %s56 = sadd.s32 0, 0
    %p57 = scmp.lt.s32.totalorder %s56, 0
    %s58 = scalar_select %p57, %s56, 0
    %s59 = smul.u32 2, %s58
    %p60 = scmp.eq.s32.totalorder 0, 0
    // Predicated region
    $region18: #{tpu_custom_call.1} parent=1 // pred_check
      %p61 = pneg %p60
    $region19: #{tpu_custom_call.1} parent=1 // pred_check_branch
      %63 = sbr.rel (%p61) target = $region21
    $region20: #{tpu_custom_call.1} parent=1 // pred_region
      %64 = vst [vmem:[#allocation7] sm:$0xff] 0.0
    $region21: #{tpu_custom_call.1} parent=1 // pred_fallthru
      _
    %v65 = vld [vmem:[#allocation2] sm:$0xff]
    %v66 = vld [vmem:[#allocation2 + $0x8] sm:$0xff]
    %v67 = vld [vmem:[#allocation5] sm:$0xff]
    %v68 = vld [vmem:[#allocation5 + $0x8] sm:$0xff]
    %v69 = vsub.f32 0.4, %v65
    %v70 = vsub.f32 0.4, %v66
    %v71 = vmul.f32 %v69, 8.0
    %v72 = vmul.f32 %v70, 8.0
    %v73 = vmul.f32 %v71, %v69
    %v74 = vmul.f32 %v72, %v70
    %v75 = vmul.f32 %v73, %v69
    %v76 = vmul.f32 %v74, %v70
    %v77 = vsub.f32 %v65, 0.65
    %v78 = vsub.f32 %v66, 0.65
    %v79 = vmul.f32 %v77, 4.0
    %v80 = vmul.f32 %v78, 4.0
    %v81 = vmax.f32 %v75, %v79
    %v82 = vmax.f32 %v76, %v80
    %v83 = vmax.f32 %v81, 0.0
    %v84 = vmax.f32 %v82, 0.0
    %v85 = vmul.f32 %v83, %v67
    %v86 = vmul.f32 %v84, %v68
    %v87 = vadd.f32 %v85, %v86
    %v88 = vadd.f32 %v87, 0.0
    %v89 = vld [vmem:[#allocation7] sm:$0xff]
    %v90 = vadd.f32 %v89, %v88
    %91 = vst [vmem:[#allocation7] sm:$0xff] %v90
    // Predicated region
    $region22: #{tpu_custom_call.1} parent=1 // pred_check
      _
    $region23: #{tpu_custom_call.1} parent=1 // pred_check_branch
      %93 = sbr.rel (0) target = $region25
    $region24: #{tpu_custom_call.1} parent=1 // pred_region
      %s95 = ssub.s32 128, 128
      %96 = vsyncadd [#allocation4], %s95
      %s98 = sshll.u32 [#allocation7], 4
      %s99 = int_to_ptr.vmem [resolvable:$true] %s98
      %101 = dma.vmem_to_hbm [thread:$0]  %s99, 128, %s2, [#allocation4]
    $region25: #{tpu_custom_call.1} parent=1 // pred_fallthru
      _
    // Predicated region
    $region26: #{tpu_custom_call.1} parent=1 // pred_check
      _
    $region27: #{tpu_custom_call.1} parent=1 // pred_check_branch
      %103 = sbr.rel (0) target = $region29
    $region28: #{tpu_custom_call.1} parent=1 // pred_region
      %104 = dma.done [#allocation4], 128
    $region29: #{tpu_custom_call.1} parent=1 // pred_fallthru
      _
    %105 = vsyncpa [#allocation3], 1
    %106 = vsyncpa [#allocation6], 1
    %107 = vsyncpa [#allocation4], 1

</llo_original>
